<compile_context>
chip_gen: v5e
topology: v5e:2x2
jax: 0.10.0
libtpu: 0.0.40
codegen_flags: <defaults>
</compile_context>

<pallas_src>
import functools

import jax
import jax.numpy as jnp
from jax.experimental import pallas as pl
from jax.experimental.pallas import tpu as pltpu

NEG_SLOPE = 0.01          # F.leaky_relu default negative_slope
IN_FEATS = 28 * 28        # 784
HID = 64
OUT = 10
HID_PAD = 128             # lane-dense hidden width
OUT_PAD = 128             # lane-dense output width
NEG_FILL = -1e30          # bias fill for padded (fake) classes


def _leaky_relu(x):
    return jnp.where(x > 0, x, NEG_SLOPE * x)


def _round_up(x, m):
    return (x + m - 1) // m * m


def mlp_kernel(x_ref, w1_ref, b1_ref, w2_ref, b2_ref, w3_ref, b3_ref, o_ref):
    # x: (TM, 784) bf16; weights bf16, biases f32; output (TM, 128) f32.
    x = x_ref[...]

    # fc1 + leaky_relu (f32 accumulate, cast back to bf16 for the next MXU pass)
    h = jnp.dot(x, w1_ref[...], preferred_element_type=jnp.float32) + b1_ref[...]
    h = _leaky_relu(h).astype(jnp.bfloat16)

    # fc2 + leaky_relu
    h = jnp.dot(h, w2_ref[...], preferred_element_type=jnp.float32) + b2_ref[...]
    h = _leaky_relu(h).astype(jnp.bfloat16)

    # fc3 (padded classes get -1e30 bias -> zero probability)
    logits = jnp.dot(h, w3_ref[...], preferred_element_type=jnp.float32) + b3_ref[...]

    # numerically stable log_softmax along the lane axis
    m = jnp.max(logits, axis=-1, keepdims=True)
    shifted = logits - m
    lse = jnp.log(jnp.sum(jnp.exp(shifted), axis=-1, keepdims=True))
    o_ref[...] = shifted - lse            # lane-dense (TM, 128) f32 store


def pad_params(params):
    """Pad PyTorch-shaped params to lane-dense 128-wide bf16 weights / f32 biases."""
    w1, b1, w2, b2, w3, b3 = params
    w1p = jnp.zeros((IN_FEATS, HID_PAD), jnp.bfloat16).at[:, :HID].set(w1.astype(jnp.bfloat16))
    b1p = jnp.zeros((1, HID_PAD), jnp.float32).at[:, :HID].set(b1.astype(jnp.float32))
    w2p = jnp.zeros((HID_PAD, HID_PAD), jnp.bfloat16).at[:HID, :HID].set(w2.astype(jnp.bfloat16))
    b2p = jnp.zeros((1, HID_PAD), jnp.float32).at[:, :HID].set(b2.astype(jnp.float32))
    w3p = jnp.zeros((HID_PAD, OUT_PAD), jnp.bfloat16).at[:HID, :OUT].set(w3.astype(jnp.bfloat16))
    b3p = jnp.full((1, OUT_PAD), NEG_FILL, jnp.float32).at[:, :OUT].set(b3.astype(jnp.float32))
    return w1p, b1p, w2p, b2p, w3p, b3p


@functools.partial(jax.jit, static_argnames=("tm",))
def cnn_forward(x_nchw, params, *, tm=256):
    """x_nchw: (B, 1, 28, 28) -> (B, 10) float32 log-probabilities."""
    w1p, b1p, w2p, b2p, w3p, b3p = pad_params(params)

    B = x_nchw.shape[0]
    x2d = x_nchw.reshape(B, -1).astype(jnp.bfloat16)   # torch.flatten(x, 1)

    # Batch tile: multiple of 8 sublanes, capped at the (padded) batch size.
    tm_eff = min(tm, _round_up(B, 8))
    Bp = _round_up(B, tm_eff)
    if Bp != B:
        x2d = jnp.pad(x2d, ((0, Bp - B), (0, 0)))

    # Weights/biases: full arrays, constant index_map -> VMEM-resident.
    resident = lambda arr: pl.BlockSpec(arr.shape, lambda i: (0, 0))

    out_padded = pl.pallas_call(
        mlp_kernel,
        out_shape=jax.ShapeDtypeStruct((Bp, OUT_PAD), jnp.float32),
        grid=(Bp // tm_eff,),
        in_specs=[
            pl.BlockSpec((tm_eff, IN_FEATS), lambda i: (i, 0)),   # streamed x tiles
            resident(w1p), resident(b1p),
            resident(w2p), resident(b2p),
            resident(w3p), resident(b3p),
        ],
        out_specs=pl.BlockSpec((tm_eff, OUT_PAD), lambda i: (i, 0)),
        compiler_params=pltpu.CompilerParams(
            dimension_semantics=("parallel",),   # megacore-shard the batch axis
        ),
    )(x2d, w1p, b1p, w2p, b2p, w3p, b3p)

    return out_padded[:B, :OUT]


def init_params(key):
    """Deterministic init matching nn.Linear shapes (stored transposed: (in, out))."""
    def linear(k, fan_in, fan_out):
        kw, kb = jax.random.split(k)
        bound = 1.0 / jnp.sqrt(fan_in)  # PyTorch default Linear init range
        w = jax.random.uniform(kw, (fan_in, fan_out), jnp.float32, -bound, bound)
        b = jax.random.uniform(kb, (1, fan_out), jnp.float32, -bound, bound)
        return w, b

    k1, k2, k3 = jax.random.split(key, 3)
    w1, b1 = linear(k1, IN_FEATS, HID)
    w2, b2 = linear(k2, HID, HID)
    w3, b3 = linear(k3, HID, OUT)
    return (w1, b1, w2, b2, w3, b3)


def reference_forward(x_nchw, params):
    """Pure-JAX f32 reference of the PyTorch forward."""
    w1, b1, w2, b2, w3, b3 = params
    h = x_nchw.reshape(x_nchw.shape[0], -1) @ w1 + b1
    h = jnp.where(h > 0, h, NEG_SLOPE * h)
    h = h @ w2 + b2
    h = jnp.where(h > 0, h, NEG_SLOPE * h)
    logits = h @ w3 + b3
    return jax.nn.log_softmax(logits, axis=1)


if __name__ == "__main__":
    key = jax.random.PRNGKey(0)
    kx, kp = jax.random.split(key)

    # Small MNIST-like batch: NCHW (B=8, C=1, H=28, W=28)
    x = jax.random.normal(kx, (8, 1, 28, 28), jnp.float32)
    params = init_params(kp)

    out = cnn_forward(x, params)
    out = jax.block_until_ready(out)

    assert out.shape == (8, 10)

    # sanity: log_softmax rows should sum (in prob space) to ~1
    row_sums = jnp.exp(out).sum(axis=-1)
    assert bool(jnp.all(jnp.abs(row_sums - 1.0) < 1e-3))

    # correctness vs f32 reference (kernel uses bf16 weights -> loose tolerance)
    ref = reference_forward(x, params)
    assert bool(jnp.max(jnp.abs(out - ref)) < 5e-2)

    print("KERNEL_OK")
</pallas_src>

<mosaic_0001>
module attributes {stable_mosaic.version = 11 : i64} {
  func.func @mlp_kernel(%arg0: i32, %arg1: memref<8x784xbf16, #tpu.memory_space<vmem>>, %arg2: memref<784x128xbf16, #tpu.memory_space<vmem>>, %arg3: memref<1x128xf32, #tpu.memory_space<vmem>>, %arg4: memref<128x128xbf16, #tpu.memory_space<vmem>>, %arg5: memref<1x128xf32, #tpu.memory_space<vmem>>, %arg6: memref<128x128xbf16, #tpu.memory_space<vmem>>, %arg7: memref<1x128xf32, #tpu.memory_space<vmem>>, %arg8: memref<8x128xf32, #tpu.memory_space<vmem>>) attributes {dimension_semantics = [#tpu.dimension_semantics<parallel>], iteration_bounds = array<i64: 1>, scalar_prefetch = 0 : i64, scratch_operands = 0 : i64, tpu.core_type = #tpu.core_type<tc>, window_params = [{transform_indices = @transform_0, window_bounds = array<i64: 8, 784>}, {pipeline_mode = #tpu.pipeline_mode<synchronous>, transform_indices = @transform_1, window_bounds = array<i64: 784, 128>}, {pipeline_mode = #tpu.pipeline_mode<synchronous>, transform_indices = @transform_2, window_bounds = array<i64: 1, 128>}, {pipeline_mode = #tpu.pipeline_mode<synchronous>, transform_indices = @transform_3, window_bounds = array<i64: 128, 128>}, {pipeline_mode = #tpu.pipeline_mode<synchronous>, transform_indices = @transform_4, window_bounds = array<i64: 1, 128>}, {pipeline_mode = #tpu.pipeline_mode<synchronous>, transform_indices = @transform_5, window_bounds = array<i64: 128, 128>}, {pipeline_mode = #tpu.pipeline_mode<synchronous>, transform_indices = @transform_6, window_bounds = array<i64: 1, 128>}, {transform_indices = @transform_7, window_bounds = array<i64: 8, 128>}]} {
    %c0 = arith.constant 0 : index
    %c0_0 = arith.constant 0 : index
    %0 = vector.load %arg1[%c0, %c0_0] : memref<8x784xbf16, #tpu.memory_space<vmem>>, vector<8x784xbf16>
    %c0_1 = arith.constant 0 : index
    %c0_2 = arith.constant 0 : index
    %1 = vector.load %arg2[%c0_1, %c0_2] : memref<784x128xbf16, #tpu.memory_space<vmem>>, vector<784x128xbf16>
    %cst = arith.constant dense<0.000000e+00> : vector<8x128xf32>
    %2 = tpu.matmul %0, %1, %cst {dimension_numbers = #tpu.dot_dimension_numbers<[1], [0], [0], [1], [0, 0, 1, 1], [], []>} : vector<8x784xbf16>, vector<784x128xbf16>, vector<8x128xf32> -> vector<8x128xf32>
    %c0_3 = arith.constant 0 : index
    %c0_4 = arith.constant 0 : index
    %3 = vector.load %arg3[%c0_3, %c0_4] : memref<1x128xf32, #tpu.memory_space<vmem>>, vector<1x128xf32>
    %4 = vector.broadcast %3 : vector<1x128xf32> to vector<8x128xf32>
    %5 = arith.addf %2, %4 : vector<8x128xf32>
    %cst_5 = arith.constant 0.000000e+00 : f32
    %6 = vector.broadcast %cst_5 : f32 to vector<8x128xf32>
    %7 = arith.cmpf ogt, %5, %6 : vector<8x128xf32>
    %cst_6 = arith.constant 0.00999999977 : f32
    %8 = vector.broadcast %cst_6 : f32 to vector<8x128xf32>
    %9 = arith.mulf %8, %5 : vector<8x128xf32>
    %10 = arith.select %7, %5, %9 : vector<8x128xi1>, vector<8x128xf32>
    %11 = arith.truncf %10 : vector<8x128xf32> to vector<8x128xbf16>
    %c0_7 = arith.constant 0 : index
    %c0_8 = arith.constant 0 : index
    %12 = vector.load %arg4[%c0_7, %c0_8] : memref<128x128xbf16, #tpu.memory_space<vmem>>, vector<128x128xbf16>
    %cst_9 = arith.constant dense<0.000000e+00> : vector<8x128xf32>
    %13 = tpu.matmul %11, %12, %cst_9 {dimension_numbers = #tpu.dot_dimension_numbers<[1], [0], [0], [1], [0, 0, 1, 1], [], []>} : vector<8x128xbf16>, vector<128x128xbf16>, vector<8x128xf32> -> vector<8x128xf32>
    %c0_10 = arith.constant 0 : index
    %c0_11 = arith.constant 0 : index
    %14 = vector.load %arg5[%c0_10, %c0_11] : memref<1x128xf32, #tpu.memory_space<vmem>>, vector<1x128xf32>
    %15 = vector.broadcast %14 : vector<1x128xf32> to vector<8x128xf32>
    %16 = arith.addf %13, %15 : vector<8x128xf32>
    %cst_12 = arith.constant 0.000000e+00 : f32
    %17 = vector.broadcast %cst_12 : f32 to vector<8x128xf32>
    %18 = arith.cmpf ogt, %16, %17 : vector<8x128xf32>
    %cst_13 = arith.constant 0.00999999977 : f32
    %19 = vector.broadcast %cst_13 : f32 to vector<8x128xf32>
    %20 = arith.mulf %19, %16 : vector<8x128xf32>
    %21 = arith.select %18, %16, %20 : vector<8x128xi1>, vector<8x128xf32>
    %22 = arith.truncf %21 : vector<8x128xf32> to vector<8x128xbf16>
    %c0_14 = arith.constant 0 : index
    %c0_15 = arith.constant 0 : index
    %23 = vector.load %arg6[%c0_14, %c0_15] : memref<128x128xbf16, #tpu.memory_space<vmem>>, vector<128x128xbf16>
    %cst_16 = arith.constant dense<0.000000e+00> : vector<8x128xf32>
    %24 = tpu.matmul %22, %23, %cst_16 {dimension_numbers = #tpu.dot_dimension_numbers<[1], [0], [0], [1], [0, 0, 1, 1], [], []>} : vector<8x128xbf16>, vector<128x128xbf16>, vector<8x128xf32> -> vector<8x128xf32>
    %c0_17 = arith.constant 0 : index
    %c0_18 = arith.constant 0 : index
    %25 = vector.load %arg7[%c0_17, %c0_18] : memref<1x128xf32, #tpu.memory_space<vmem>>, vector<1x128xf32>
    %26 = vector.broadcast %25 : vector<1x128xf32> to vector<8x128xf32>
    %27 = arith.addf %24, %26 : vector<8x128xf32>
    %cst_19 = arith.constant dense<0xFF800000> : vector<8xf32>
    %28 = vector.multi_reduction <maximumf>, %27, %cst_19 [1] : vector<8x128xf32> to vector<8xf32>
    %29 = vector.shape_cast %28 : vector<8xf32> to vector<8x1xf32>
    %30 = vector.broadcast %29 : vector<8x1xf32> to vector<8x128xf32>
    %31 = arith.subf %27, %30 : vector<8x128xf32>
    %32 = math.exp %31 : vector<8x128xf32>
    %cst_20 = arith.constant dense<0.000000e+00> : vector<8xf32>
    %33 = vector.multi_reduction <add>, %32, %cst_20 [1] : vector<8x128xf32> to vector<8xf32>
    %34 = vector.shape_cast %33 : vector<8xf32> to vector<8x1xf32>
    %35 = math.log %34 : vector<8x1xf32>
    %36 = vector.broadcast %35 : vector<8x1xf32> to vector<8x128xf32>
    %37 = arith.subf %31, %36 : vector<8x128xf32>
    %c0_21 = arith.constant 0 : index
    %c0_22 = arith.constant 0 : index
    %38 = vector.load %arg8[%c0_21, %c0_22] : memref<8x128xf32, #tpu.memory_space<vmem>>, vector<8x128xf32>
    tpu.vector_store %arg8[%c0_21, %c0_22], %37 {strides = array<i32>} : memref<8x128xf32, #tpu.memory_space<vmem>>, vector<8x128xf32>,
    return
  }
  func.func @transform_0(%arg0: i32) -> (i32, i32) {
    %c0_i32 = arith.constant 0 : i32
    %c0_i32_0 = arith.constant 0 : i32
    return %arg0, %c0_i32 : i32, i32
  }
  func.func @transform_1(%arg0: i32) -> (i32, i32) {
    %c0_i32 = arith.constant 0 : i32
    %c0_i32_0 = arith.constant 0 : i32
    %c0_i32_1 = arith.constant 0 : i32
    return %c0_i32, %c0_i32_0 : i32, i32
  }
  func.func @transform_2(%arg0: i32) -> (i32, i32) {
    %c0_i32 = arith.constant 0 : i32
    %c0_i32_0 = arith.constant 0 : i32
    %c0_i32_1 = arith.constant 0 : i32
    return %c0_i32, %c0_i32_0 : i32, i32
  }
  func.func @transform_3(%arg0: i32) -> (i32, i32) {
    %c0_i32 = arith.constant 0 : i32
    %c0_i32_0 = arith.constant 0 : i32
    %c0_i32_1 = arith.constant 0 : i32
    return %c0_i32, %c0_i32_0 : i32, i32
  }
  func.func @transform_4(%arg0: i32) -> (i32, i32) {
    %c0_i32 = arith.constant 0 : i32
    %c0_i32_0 = arith.constant 0 : i32
    %c0_i32_1 = arith.constant 0 : i32
    return %c0_i32, %c0_i32_0 : i32, i32
  }
  func.func @transform_5(%arg0: i32) -> (i32, i32) {
    %c0_i32 = arith.constant 0 : i32
    %c0_i32_0 = arith.constant 0 : i32
    %c0_i32_1 = arith.constant 0 : i32
    return %c0_i32, %c0_i32_0 : i32, i32
  }
  func.func @transform_6(%arg0: i32) -> (i32, i32) {
    %c0_i32 = arith.constant 0 : i32
    %c0_i32_0 = arith.constant 0 : i32
    %c0_i32_1 = arith.constant 0 : i32
    return %c0_i32, %c0_i32_0 : i32, i32
  }
  func.func @transform_7(%arg0: i32) -> (i32, i32) {
    %c0_i32 = arith.constant 0 : i32
    %c0_i32_0 = arith.constant 0 : i32
    return %arg0, %c0_i32 : i32, i32
  }
}

</mosaic_0001>

<llo_original>
// kernel: cnn_forward.1
$region0: #{cnn_forward.1}
  #allocation0 [shape = 'u32[]', space=smem, size = 0x4, offset = 0x4, fixed_abs, tag = 'smem constant byte address 0x4 - core index']
  #allocation1 [shape = 'u32[72,128]{1,0:T(1,128)}', space=vmem, size = 0x9000, scoped, tag = 'internal scratch']
  %s0 = inlined_call_operand.vmem [shape: bf16[8,784], index: 0, kind: input, shape index: {}]
  %s1 = inlined_call_operand.vmem [shape: bf16[784,128], index: 1, kind: input, shape index: {}]
  %s2 = inlined_call_operand.vmem [shape: f32[1,128], index: 2, kind: input, shape index: {}]
  %s3 = inlined_call_operand.vmem [shape: bf16[128,128], index: 3, kind: input, shape index: {}]
  %s4 = inlined_call_operand.vmem [shape: f32[1,128], index: 4, kind: input, shape index: {}]
  %s5 = inlined_call_operand.vmem [shape: bf16[128,128], index: 5, kind: input, shape index: {}]
  %s6 = inlined_call_operand.vmem [shape: f32[1,128], index: 6, kind: input, shape index: {}]
  %s7 = inlined_call_operand.hbm [shape: f32[8,128], index: 7, kind: output, shape index: {}]
  %s8 = sld [smem:[#allocation0]]
  $region38: #{cnn_forward.1} parent=0
    _
  %s10 = ssub.s32 1, %s8
  %s11 = scalar_select 0, %s10, %s8
  $region1: #{cnn_forward.1} parent=0
    #allocation2 [shape = 'u8[4096]{0}', space=vmem, size = 0x1000, scoped, tag = 'output window, operand 0, single buffered']
    #allocation3 [shape = 's32[1]{0}', space=sflag, size = 0x4, scoped, tag = 'scoped memory for cnn_forward.1']
    %12 = vsyncpa [#allocation3], 0
    // Predicated region
    $region2: #{cnn_forward.1} parent=1 // pred_check
      _
    $region3: #{cnn_forward.1} parent=1 // pred_check_branch
      %14 = sbr.rel (0) target = $region5
    $region4: #{cnn_forward.1} parent=1 // pred_region
      _
    $region5: #{cnn_forward.1} parent=1 // pred_fallthru
      _
    // Predicated region
    $region6: #{cnn_forward.1} parent=1 // pred_check
      _
    $region7: #{cnn_forward.1} parent=1 // pred_check_branch
      %16 = sbr.rel (0) target = $region9
    $region8: #{cnn_forward.1} parent=1 // pred_region
      _
    $region9: #{cnn_forward.1} parent=1 // pred_fallthru
      _
    // Predicated region
    $region10: #{cnn_forward.1} parent=1 // pred_check
      _
    $region11: #{cnn_forward.1} parent=1 // pred_check_branch
      %18 = sbr.rel (0) target = $region13
    $region12: #{cnn_forward.1} parent=1 // pred_region
      _
    $region13: #{cnn_forward.1} parent=1 // pred_fallthru
      _
    // Predicated region
    $region14: #{cnn_forward.1} parent=1 // pred_check
      _
    $region15: #{cnn_forward.1} parent=1 // pred_check_branch
      %20 = sbr.rel (0) target = $region17
    $region16: #{cnn_forward.1} parent=1 // pred_region
      _
    $region17: #{cnn_forward.1} parent=1 // pred_fallthru
      _
    // Predicated region
    $region18: #{cnn_forward.1} parent=1 // pred_check
      _
    $region19: #{cnn_forward.1} parent=1 // pred_check_branch
      %22 = sbr.rel (0) target = $region21
    $region20: #{cnn_forward.1} parent=1 // pred_region
      _
    $region21: #{cnn_forward.1} parent=1 // pred_fallthru
      _
    // Predicated region
    $region22: #{cnn_forward.1} parent=1 // pred_check
      _
    $region23: #{cnn_forward.1} parent=1 // pred_check_branch
      %24 = sbr.rel (0) target = $region25
    $region24: #{cnn_forward.1} parent=1 // pred_region
      _
    $region25: #{cnn_forward.1} parent=1 // pred_fallthru
      _
    // Predicated region
    $region26: #{cnn_forward.1} parent=1 // pred_check
      _
    $region27: #{cnn_forward.1} parent=1 // pred_check_branch
      %26 = sbr.rel (0) target = $region29
    $region28: #{cnn_forward.1} parent=1 // pred_region
      _
    $region29: #{cnn_forward.1} parent=1 // pred_fallthru
      _
    %v28 = vld [vmem:[%s0] sm:$0xff]
    %v29 = vld [vmem:[%s0 + $0x8] sm:$0xff]
    %v30 = vld [vmem:[%s0 + $0x10] sm:$0xff]
    %v31 = vld [vmem:[%s0 + $0x18] sm:$0xf]
    %v32 = vld [vmem:[%s1] sm:$0xf]
    %v33 = vld [vmem:[%s1 + $0x4] sm:$0xf]
    %v34 = vld [vmem:[%s1 + $0x8] sm:$0xf]
    %v35 = vld [vmem:[%s1 + $0xc] sm:$0xf]
    %v36 = vld [vmem:[%s1 + $0x10] sm:$0xf]
    %v37 = vld [vmem:[%s1 + $0x14] sm:$0xf]
    %v38 = vld [vmem:[%s1 + $0x18] sm:$0xf]
    %v39 = vld [vmem:[%s1 + $0x1c] sm:$0xf]
    %v40 = vld [vmem:[%s1 + $0x20] sm:$0xf]
    %v41 = vld [vmem:[%s1 + $0x24] sm:$0xf]
    %v42 = vld [vmem:[%s1 + $0x28] sm:$0xf]
    %v43 = vld [vmem:[%s1 + $0x2c] sm:$0xf]
    %v44 = vld [vmem:[%s1 + $0x30] sm:$0xf]
    %v45 = vld [vmem:[%s1 + $0x34] sm:$0xf]
    %v46 = vld [vmem:[%s1 + $0x38] sm:$0xf]
    %v47 = vld [vmem:[%s1 + $0x3c] sm:$0xf]
    %v48 = vld [vmem:[%s1 + $0x40] sm:$0xf]
    %v49 = vld [vmem:[%s1 + $0x44] sm:$0xf]
    %v50 = vld [vmem:[%s1 + $0x48] sm:$0xf]
    %v51 = vld [vmem:[%s1 + $0x4c] sm:$0xf]
    %v52 = vld [vmem:[%s1 + $0x50] sm:$0xf]
    %v53 = vld [vmem:[%s1 + $0x54] sm:$0xf]
    %v54 = vld [vmem:[%s1 + $0x58] sm:$0xf]
    %v55 = vld [vmem:[%s1 + $0x5c] sm:$0xf]
    %v56 = vld [vmem:[%s1 + $0x60] sm:$0xf]
    %v57 = vld [vmem:[%s1 + $0x64] sm:$0xf]
    %v58 = vld [vmem:[%s1 + $0x68] sm:$0xf]
    %v59 = vld [vmem:[%s1 + $0x6c] sm:$0xf]
    %v60 = vld [vmem:[%s1 + $0x70] sm:$0xf]
    %v61 = vld [vmem:[%s1 + $0x74] sm:$0xf]
    %v62 = vld [vmem:[%s1 + $0x78] sm:$0xf]
    %v63 = vld [vmem:[%s1 + $0x7c] sm:$0xf]
    %v64 = vld [vmem:[%s1 + $0x80] sm:$0xf]
    %v65 = vld [vmem:[%s1 + $0x84] sm:$0xf]
    %v66 = vld [vmem:[%s1 + $0x88] sm:$0xf]
    %v67 = vld [vmem:[%s1 + $0x8c] sm:$0xf]
    %v68 = vld [vmem:[%s1 + $0x90] sm:$0xf]
    %v69 = vld [vmem:[%s1 + $0x94] sm:$0xf]
    %v70 = vld [vmem:[%s1 + $0x98] sm:$0xf]
    %v71 = vld [vmem:[%s1 + $0x9c] sm:$0xf]
    %v72 = vld [vmem:[%s1 + $0xa0] sm:$0xf]
    %v73 = vld [vmem:[%s1 + $0xa4] sm:$0xf]
    %v74 = vld [vmem:[%s1 + $0xa8] sm:$0xf]
    %v75 = vld [vmem:[%s1 + $0xac] sm:$0xf]
    %v76 = vld [vmem:[%s1 + $0xb0] sm:$0xf]
    %v77 = vld [vmem:[%s1 + $0xb4] sm:$0xf]
    %v78 = vld [vmem:[%s1 + $0xb8] sm:$0xf]
    %v79 = vld [vmem:[%s1 + $0xbc] sm:$0xf]
    %v80 = vld [vmem:[%s1 + $0xc0] sm:$0xf]
    %v81 = vld [vmem:[%s1 + $0xc4] sm:$0xf]
    %v82 = vld [vmem:[%s1 + $0xc8] sm:$0xf]
    %v83 = vld [vmem:[%s1 + $0xcc] sm:$0xf]
    %v84 = vld [vmem:[%s1 + $0xd0] sm:$0xf]
    %v85 = vld [vmem:[%s1 + $0xd4] sm:$0xf]
    %v86 = vld [vmem:[%s1 + $0xd8] sm:$0xf]
    %v87 = vld [vmem:[%s1 + $0xdc] sm:$0xf]
    %v88 = vld [vmem:[%s1 + $0xe0] sm:$0xf]
    %v89 = vld [vmem:[%s1 + $0xe4] sm:$0xf]
    %v90 = vld [vmem:[%s1 + $0xe8] sm:$0xf]
    %v91 = vld [vmem:[%s1 + $0xec] sm:$0xf]
    %v92 = vld [vmem:[%s1 + $0xf0] sm:$0xf]
    %v93 = vld [vmem:[%s1 + $0xf4] sm:$0xf]
    %v94 = vld [vmem:[%s1 + $0xf8] sm:$0xf]
    %v95 = vld [vmem:[%s1 + $0xfc] sm:$0xf]
    %v96 = vld [vmem:[%s1 + $0x100] sm:$0xf]
    %v97 = vld [vmem:[%s1 + $0x104] sm:$0xf]
    %v98 = vld [vmem:[%s1 + $0x108] sm:$0xf]
    %v99 = vld [vmem:[%s1 + $0x10c] sm:$0xf]
    %v100 = vld [vmem:[%s1 + $0x110] sm:$0xf]
    %v101 = vld [vmem:[%s1 + $0x114] sm:$0xf]
    %v102 = vld [vmem:[%s1 + $0x118] sm:$0xf]
    %v103 = vld [vmem:[%s1 + $0x11c] sm:$0xf]
    %v104 = vld [vmem:[%s1 + $0x120] sm:$0xf]
    %v105 = vld [vmem:[%s1 + $0x124] sm:$0xf]
    %v106 = vld [vmem:[%s1 + $0x128] sm:$0xf]
    %v107 = vld [vmem:[%s1 + $0x12c] sm:$0xf]
    %v108 = vld [vmem:[%s1 + $0x130] sm:$0xf]
    %v109 = vld [vmem:[%s1 + $0x134] sm:$0xf]
    %v110 = vld [vmem:[%s1 + $0x138] sm:$0xf]
    %v111 = vld [vmem:[%s1 + $0x13c] sm:$0xf]
    %v112 = vld [vmem:[%s1 + $0x140] sm:$0xf]
    %v113 = vld [vmem:[%s1 + $0x144] sm:$0xf]
    %v114 = vld [vmem:[%s1 + $0x148] sm:$0xf]
    %v115 = vld [vmem:[%s1 + $0x14c] sm:$0xf]
    %v116 = vld [vmem:[%s1 + $0x150] sm:$0xf]
    %v117 = vld [vmem:[%s1 + $0x154] sm:$0xf]
    %v118 = vld [vmem:[%s1 + $0x158] sm:$0xf]
    %v119 = vld [vmem:[%s1 + $0x15c] sm:$0xf]
    %v120 = vld [vmem:[%s1 + $0x160] sm:$0xf]
    %v121 = vld [vmem:[%s1 + $0x164] sm:$0xf]
    %v122 = vld [vmem:[%s1 + $0x168] sm:$0xf]
    %v123 = vld [vmem:[%s1 + $0x16c] sm:$0xf]
    %v124 = vld [vmem:[%s1 + $0x170] sm:$0xf]
    %v125 = vld [vmem:[%s1 + $0x174] sm:$0xf]
    %v126 = vld [vmem:[%s1 + $0x178] sm:$0xf]
    %v127 = vld [vmem:[%s1 + $0x17c] sm:$0xf]
    %v128 = vld [vmem:[%s1 + $0x180] sm:$0xf]
    %v129 = vld [vmem:[%s1 + $0x184] sm:$0xf]
    %v130 = vld [vmem:[%s2] sm:$0x1]
    %v132 = vperm.slane %v130, 0
    %v138 = vunpack.c.l.b16 %v28
    %v139 = vunpack.c.h.b16 %v28
    %v140 = vunpack.c.l.b16 %v29
    %v141 = vunpack.c.h.b16 %v29
    %v142 = vunpack.c.l.b16 %v30
    %v143 = vunpack.c.h.b16 %v30
    %v144 = vunpack.c.l.b16 %v31
    %v145 = vpack.c.b16 %v138, %v138
    %v146 = vpack.c.b16 %v139, %v139
    %v147 = vpack.c.b16 %v140, %v140
    %v148 = vpack.c.b16 %v141, %v141
    %v149 = vpack.c.b16 %v142, %v142
    %v150 = vpack.c.b16 %v143, %v143
    %v151 = vpack.c.b16 %v144, %v144
    %v256 = vunpack.c.l.b16 %v32
    %v257 = vunpack.c.l.b16 %v33
    %v258 = vunpack.c.l.b16 %v34
    %v259 = vunpack.c.l.b16 %v35
    %v260 = vunpack.c.l.b16 %v36
    %v261 = vunpack.c.l.b16 %v37
    %v262 = vunpack.c.l.b16 %v38
    %v263 = vunpack.c.l.b16 %v39
    %v264 = vunpack.c.l.b16 %v40
    %v265 = vunpack.c.l.b16 %v41
    %v266 = vunpack.c.l.b16 %v42
    %v267 = vunpack.c.l.b16 %v43
    %v268 = vunpack.c.l.b16 %v44
    %v269 = vunpack.c.l.b16 %v45
    %v270 = vunpack.c.l.b16 %v46
    %v271 = vunpack.c.l.b16 %v47
    %v272 = vunpack.c.l.b16 %v48
    %v273 = vunpack.c.l.b16 %v49
    %v274 = vunpack.c.l.b16 %v50
    %v275 = vunpack.c.l.b16 %v51
    %v276 = vunpack.c.l.b16 %v52
    %v277 = vunpack.c.l.b16 %v53
    %v278 = vunpack.c.l.b16 %v54
    %v279 = vunpack.c.l.b16 %v55
    %v280 = vunpack.c.l.b16 %v56
    %v281 = vunpack.c.l.b16 %v57
    %v282 = vunpack.c.l.b16 %v58
    %v283 = vunpack.c.l.b16 %v59
    %v284 = vunpack.c.l.b16 %v60
    %v285 = vunpack.c.l.b16 %v61
    %v286 = vunpack.c.l.b16 %v62
    %v287 = vunpack.c.l.b16 %v63
    %v288 = vunpack.c.l.b16 %v64
    %v289 = vunpack.c.l.b16 %v65
    %v290 = vunpack.c.l.b16 %v66
    %v291 = vunpack.c.l.b16 %v67
    %v292 = vunpack.c.l.b16 %v68
    %v293 = vunpack.c.l.b16 %v69
    %v294 = vunpack.c.l.b16 %v70
    %v295 = vunpack.c.l.b16 %v71
    %v296 = vunpack.c.l.b16 %v72
    %v297 = vunpack.c.l.b16 %v73
    %v298 = vunpack.c.l.b16 %v74
    %v299 = vunpack.c.l.b16 %v75
    %v300 = vunpack.c.l.b16 %v76
    %v301 = vunpack.c.l.b16 %v77
    %v302 = vunpack.c.l.b16 %v78
    %v303 = vunpack.c.l.b16 %v79
    %v304 = vunpack.c.l.b16 %v80
    %v305 = vunpack.c.l.b16 %v81
    %v306 = vunpack.c.l.b16 %v82
    %v307 = vunpack.c.l.b16 %v83
    %v308 = vunpack.c.l.b16 %v84
    %v309 = vunpack.c.l.b16 %v85
    %v310 = vunpack.c.l.b16 %v86
    %v311 = vunpack.c.l.b16 %v87
    %v312 = vunpack.c.l.b16 %v88
    %v313 = vunpack.c.l.b16 %v89
    %v314 = vunpack.c.l.b16 %v90
    %v315 = vunpack.c.l.b16 %v91
    %v316 = vunpack.c.l.b16 %v92
    %v317 = vunpack.c.l.b16 %v93
    %v318 = vunpack.c.l.b16 %v94
    %v319 = vunpack.c.l.b16 %v95
    %v320 = vunpack.c.l.b16 %v96
    %v321 = vunpack.c.l.b16 %v97
    %v322 = vunpack.c.l.b16 %v98
    %v323 = vunpack.c.l.b16 %v99
    %v324 = vunpack.c.l.b16 %v100
    %v325 = vunpack.c.l.b16 %v101
    %v326 = vunpack.c.l.b16 %v102
    %v327 = vunpack.c.l.b16 %v103
    %v328 = vunpack.c.l.b16 %v104
    %v329 = vunpack.c.l.b16 %v105
    %v330 = vunpack.c.l.b16 %v106
    %v331 = vunpack.c.l.b16 %v107
    %v332 = vunpack.c.l.b16 %v108
    %v333 = vunpack.c.l.b16 %v109
    %v334 = vunpack.c.l.b16 %v110
    %v335 = vunpack.c.l.b16 %v111
    %v336 = vunpack.c.l.b16 %v112
    %v337 = vunpack.c.l.b16 %v113
    %v338 = vunpack.c.l.b16 %v114
    %v339 = vunpack.c.l.b16 %v115
    %v340 = vunpack.c.l.b16 %v116
    %v341 = vunpack.c.l.b16 %v117
    %v342 = vunpack.c.l.b16 %v118
    %v343 = vunpack.c.l.b16 %v119
    %v344 = vunpack.c.l.b16 %v120
    %v345 = vunpack.c.l.b16 %v121
    %v346 = vunpack.c.l.b16 %v122
    %v347 = vunpack.c.l.b16 %v123
    %v348 = vunpack.c.l.b16 %v124
    %v349 = vunpack.c.l.b16 %v125
    %v350 = vunpack.c.l.b16 %v126
    %v351 = vunpack.c.l.b16 %v127
    %v352 = vunpack.c.l.b16 %v128
    %v353 = vunpack.c.l.b16 %v129
    %v354 = vpack.c.b16 %v257, %v256
    %v355 = vpack.c.b16 %v259, %v258
    %v356 = vpack.c.b16 %v261, %v260
    %v357 = vpack.c.b16 %v263, %v262
    %v358 = vpack.c.b16 %v265, %v264
    %v359 = vpack.c.b16 %v267, %v266
    %v360 = vpack.c.b16 %v269, %v268
    %v361 = vpack.c.b16 %v271, %v270
    %v362 = vpack.c.b16 %v273, %v272
    %v363 = vpack.c.b16 %v275, %v274
    %v364 = vpack.c.b16 %v277, %v276
    %v365 = vpack.c.b16 %v279, %v278
    %v366 = vpack.c.b16 %v281, %v280
    %v367 = vpack.c.b16 %v283, %v282
    %v368 = vpack.c.b16 %v285, %v284
    %v369 = vpack.c.b16 %v287, %v286
    %v370 = vpack.c.b16 %v289, %v288
    %v371 = vpack.c.b16 %v291, %v290
    %v372 = vpack.c.b16 %v293, %v292
    %v373 = vpack.c.b16 %v295, %v294
    %v374 = vpack.c.b16 %v297, %v296
    %v375 = vpack.c.b16 %v299, %v298
    %v376 = vpack.c.b16 %v301, %v300
    %v377 = vpack.c.b16 %v303, %v302
    %v378 = vpack.c.b16 %v305, %v304
    %v379 = vpack.c.b16 %v307, %v306
    %v380 = vpack.c.b16 %v309, %v308
    %v381 = vpack.c.b16 %v311, %v310
    %v382 = vpack.c.b16 %v313, %v312
    %v383 = vpack.c.b16 %v315, %v314
    %v384 = vpack.c.b16 %v317, %v316
    %v385 = vpack.c.b16 %v319, %v318
    %v386 = vpack.c.b16 %v321, %v320
    %v387 = vpack.c.b16 %v323, %v322
    %v388 = vpack.c.b16 %v325, %v324
    %v389 = vpack.c.b16 %v327, %v326
    %v390 = vpack.c.b16 %v329, %v328
    %v391 = vpack.c.b16 %v331, %v330
    %v392 = vpack.c.b16 %v333, %v332
    %v393 = vpack.c.b16 %v335, %v334
    %v394 = vpack.c.b16 %v337, %v336
    %v395 = vpack.c.b16 %v339, %v338
    %v396 = vpack.c.b16 %v341, %v340
    %v397 = vpack.c.b16 %v343, %v342
    %v398 = vpack.c.b16 %v345, %v344
    %v399 = vpack.c.b16 %v347, %v346
    %v400 = vpack.c.b16 %v349, %v348
    %v401 = vpack.c.b16 %v351, %v350
    %v402 = vpack.c.b16 %v353, %v352
    %vm452 = vcmask 130048
    %v454 = vsel %vm452, %v151, 0
    %456 = vmatpush.bf16.msra.mxu0 %v361
    %457 = vmatpush.bf16.msra.mxu0 %v360
    %458 = vmatpush.bf16.msra.mxu0 %v359
    %459 = vmatpush.bf16.msra.mxu0 %v358
    %460 = vmatpush.bf16.msra.mxu0 %v357
    %461 = vmatpush.bf16.msra.mxu0 %v356
    %462 = vmatpush.bf16.msra.mxu0 %v355
    %463 = vmatpush.bf16.msra.mxu0 %v354
    %464 = vmatmul.bf16.gmra.mxu0 %v145
    %v465 = vpop.f32.mrf.mxu0
    %v466 = vadd.f32 %v132, %v465
    %v467 = vpop.f32.mrf.mxu0
    %468 = vdwg.mxu0
    %469 = vmatpush.bf16.msra.mxu0 %v369
    %470 = vmatpush.bf16.msra.mxu0 %v368
    %471 = vmatpush.bf16.msra.mxu0 %v367
    %472 = vmatpush.bf16.msra.mxu0 %v366
    %473 = vmatpush.bf16.msra.mxu0 %v365
    %474 = vmatpush.bf16.msra.mxu0 %v364
    %475 = vmatpush.bf16.msra.mxu0 %v363
    %476 = vmatpush.bf16.msra.mxu0 %v362
    %477 = vmatmul.bf16.gmra.mxu0 %v146
    %v478 = vpop.f32.mrf.mxu0
    %v479 = vadd.f32 %v466, %v478
    %v480 = vpop.f32.mrf.mxu0
    %481 = vdwg.mxu0
    %482 = vmatpush.bf16.msra.mxu0 %v377
    %483 = vmatpush.bf16.msra.mxu0 %v376
    %484 = vmatpush.bf16.msra.mxu0 %v375
    %485 = vmatpush.bf16.msra.mxu0 %v374
    %486 = vmatpush.bf16.msra.mxu0 %v373
    %487 = vmatpush.bf16.msra.mxu0 %v372
    %488 = vmatpush.bf16.msra.mxu0 %v371
    %489 = vmatpush.bf16.msra.mxu0 %v370
    %490 = vmatmul.bf16.gmra.mxu0 %v147
    %v491 = vpop.f32.mrf.mxu0
    %v492 = vadd.f32 %v479, %v491
    %v493 = vpop.f32.mrf.mxu0
    %494 = vdwg.mxu0
    %495 = vmatpush.bf16.msra.mxu0 %v385
    %496 = vmatpush.bf16.msra.mxu0 %v384
    %497 = vmatpush.bf16.msra.mxu0 %v383
    %498 = vmatpush.bf16.msra.mxu0 %v382
    %499 = vmatpush.bf16.msra.mxu0 %v381
    %500 = vmatpush.bf16.msra.mxu0 %v380
    %501 = vmatpush.bf16.msra.mxu0 %v379
    %502 = vmatpush.bf16.msra.mxu0 %v378
    %503 = vmatmul.bf16.gmra.mxu0 %v148
    %v504 = vpop.f32.mrf.mxu0
    %v505 = vadd.f32 %v492, %v504
    %v506 = vpop.f32.mrf.mxu0
    %507 = vdwg.mxu0
    %508 = vmatpush.bf16.msra.mxu0 %v393
    %509 = vmatpush.bf16.msra.mxu0 %v392
    %510 = vmatpush.bf16.msra.mxu0 %v391
    %511 = vmatpush.bf16.msra.mxu0 %v390
    %512 = vmatpush.bf16.msra.mxu0 %v389
    %513 = vmatpush.bf16.msra.mxu0 %v388
    %514 = vmatpush.bf16.msra.mxu0 %v387
    %515 = vmatpush.bf16.msra.mxu0 %v386
    %516 = vmatmul.bf16.gmra.mxu0 %v149
    %v517 = vpop.f32.mrf.mxu0
    %v518 = vadd.f32 %v505, %v517
    %v519 = vpop.f32.mrf.mxu0
    %520 = vdwg.mxu0
    %521 = vmatpush.bf16.msra.mxu0 %v401
    %522 = vmatpush.bf16.msra.mxu0 %v400
    %523 = vmatpush.bf16.msra.mxu0 %v399
    %524 = vmatpush.bf16.msra.mxu0 %v398
    %525 = vmatpush.bf16.msra.mxu0 %v397
    %526 = vmatpush.bf16.msra.mxu0 %v396
    %527 = vmatpush.bf16.msra.mxu0 %v395
    %528 = vmatpush.bf16.msra.mxu0 %v394
    %529 = vmatmul.bf16.gmra.mxu0 %v150
    %v530 = vpop.f32.mrf.mxu0
    %v531 = vadd.f32 %v518, %v530
    %v532 = vpop.f32.mrf.mxu0
    %533 = vdwg.mxu0
    %534 = vmatpush.bf16.msra.mxu0 0
    %535 = vmatpush.bf16.msra.mxu0 0
    %536 = vmatpush.bf16.msra.mxu0 0
    %537 = vmatpush.bf16.msra.mxu0 0
    %538 = vmatpush.bf16.msra.mxu0 0
    %539 = vmatpush.bf16.msra.mxu0 0
    %540 = vmatpush.bf16.msra.mxu0 0
    %541 = vmatpush.bf16.msra.mxu0 %v402
    %542 = vmatmul.bf16.gmra.mxu0 %v454
    %v543 = vpop.f32.mrf.mxu0
    %v544 = vadd.f32 %v531, %v543
    %v545 = vpop.f32.mrf.mxu0
    %546 = vdwg.mxu0
    %vm547 = vcmp.gt.f32.partialorder %v544, 0.0
    %v548 = vmul.f32 %v544, 0.01
    %v549 = vsel %vm547, %v544, %v548
    %v550 = vpack.c.bf16 %v549, %v549
    %v551 = vld [vmem:[%s3] sm:$0xf]
    %v552 = vld [vmem:[%s3 + $0x4] sm:$0xf]
    %v553 = vld [vmem:[%s3 + $0x8] sm:$0xf]
    %v554 = vld [vmem:[%s3 + $0xc] sm:$0xf]
    %v555 = vld [vmem:[%s3 + $0x10] sm:$0xf]
    %v556 = vld [vmem:[%s3 + $0x14] sm:$0xf]
    %v557 = vld [vmem:[%s3 + $0x18] sm:$0xf]
    %v558 = vld [vmem:[%s3 + $0x1c] sm:$0xf]
    %v559 = vld [vmem:[%s3 + $0x20] sm:$0xf]
    %v560 = vld [vmem:[%s3 + $0x24] sm:$0xf]
    %v561 = vld [vmem:[%s3 + $0x28] sm:$0xf]
    %v562 = vld [vmem:[%s3 + $0x2c] sm:$0xf]
    %v563 = vld [vmem:[%s3 + $0x30] sm:$0xf]
    %v564 = vld [vmem:[%s3 + $0x34] sm:$0xf]
    %v565 = vld [vmem:[%s3 + $0x38] sm:$0xf]
    %v566 = vld [vmem:[%s3 + $0x3c] sm:$0xf]
    %v567 = vld [vmem:[%s4] sm:$0x1]
    %v569 = vperm.slane %v567, 0
    %v587 = vunpack.c.l.b16 %v551
    %v588 = vunpack.c.l.b16 %v552
    %v589 = vunpack.c.l.b16 %v553
    %v590 = vunpack.c.l.b16 %v554
    %v591 = vunpack.c.l.b16 %v555
    %v592 = vunpack.c.l.b16 %v556
    %v593 = vunpack.c.l.b16 %v557
    %v594 = vunpack.c.l.b16 %v558
    %v595 = vunpack.c.l.b16 %v559
    %v596 = vunpack.c.l.b16 %v560
    %v597 = vunpack.c.l.b16 %v561
    %v598 = vunpack.c.l.b16 %v562
    %v599 = vunpack.c.l.b16 %v563
    %v600 = vunpack.c.l.b16 %v564
    %v601 = vunpack.c.l.b16 %v565
    %v602 = vunpack.c.l.b16 %v566
    %v603 = vpack.c.b16 %v588, %v587
    %v604 = vpack.c.b16 %v590, %v589
    %v605 = vpack.c.b16 %v592, %v591
    %v606 = vpack.c.b16 %v594, %v593
    %v607 = vpack.c.b16 %v596, %v595
    %v608 = vpack.c.b16 %v598, %v597
    %v609 = vpack.c.b16 %v600, %v599
    %v610 = vpack.c.b16 %v602, %v601
    %619 = vmatpush.bf16.msra.mxu0 %v610
    %620 = vmatpush.bf16.msra.mxu0 %v609
    %621 = vmatpush.bf16.msra.mxu0 %v608
    %622 = vmatpush.bf16.msra.mxu0 %v607
    %623 = vmatpush.bf16.msra.mxu0 %v606
    %624 = vmatpush.bf16.msra.mxu0 %v605
    %625 = vmatpush.bf16.msra.mxu0 %v604
    %626 = vmatpush.bf16.msra.mxu0 %v603
    %627 = vmatmul.bf16.gmra.mxu0 %v550
    %v628 = vpop.f32.mrf.mxu0
    %v629 = vadd.f32 %v569, %v628
    %v630 = vpop.f32.mrf.mxu0
    %631 = vdwg.mxu0
    %vm632 = vcmp.gt.f32.partialorder %v629, 0.0
    %v633 = vmul.f32 %v629, 0.01
    %v634 = vsel %vm632, %v629, %v633
    %v635 = vpack.c.bf16 %v634, %v634
    %v636 = vld [vmem:[%s5] sm:$0xf]
    %v637 = vld [vmem:[%s5 + $0x4] sm:$0xf]
    %v638 = vld [vmem:[%s5 + $0x8] sm:$0xf]
    %v639 = vld [vmem:[%s5 + $0xc] sm:$0xf]
    %v640 = vld [vmem:[%s5 + $0x10] sm:$0xf]
    %v641 = vld [vmem:[%s5 + $0x14] sm:$0xf]
    %v642 = vld [vmem:[%s5 + $0x18] sm:$0xf]
    %v643 = vld [vmem:[%s5 + $0x1c] sm:$0xf]
    %v644 = vld [vmem:[%s5 + $0x20] sm:$0xf]
    %v645 = vld [vmem:[%s5 + $0x24] sm:$0xf]
    %v646 = vld [vmem:[%s5 + $0x28] sm:$0xf]
    %v647 = vld [vmem:[%s5 + $0x2c] sm:$0xf]
    %v648 = vld [vmem:[%s5 + $0x30] sm:$0xf]
    %v649 = vld [vmem:[%s5 + $0x34] sm:$0xf]
    %v650 = vld [vmem:[%s5 + $0x38] sm:$0xf]
    %v651 = vld [vmem:[%s5 + $0x3c] sm:$0xf]
    %v652 = vld [vmem:[%s6] sm:$0x1]
    %v654 = vperm.slane %v652, 0
    %v672 = vunpack.c.l.b16 %v636
    %v673 = vunpack.c.l.b16 %v637
    %v674 = vunpack.c.l.b16 %v638
    %v675 = vunpack.c.l.b16 %v639
    %v676 = vunpack.c.l.b16 %v640
    %v677 = vunpack.c.l.b16 %v641
    %v678 = vunpack.c.l.b16 %v642
    %v679 = vunpack.c.l.b16 %v643
    %v680 = vunpack.c.l.b16 %v644
    %v681 = vunpack.c.l.b16 %v645
    %v682 = vunpack.c.l.b16 %v646
    %v683 = vunpack.c.l.b16 %v647
    %v684 = vunpack.c.l.b16 %v648
    %v685 = vunpack.c.l.b16 %v649
    %v686 = vunpack.c.l.b16 %v650
    %v687 = vunpack.c.l.b16 %v651
    %v688 = vpack.c.b16 %v673, %v672
    %v689 = vpack.c.b16 %v675, %v674
    %v690 = vpack.c.b16 %v677, %v676
    %v691 = vpack.c.b16 %v679, %v678
    %v692 = vpack.c.b16 %v681, %v680
    %v693 = vpack.c.b16 %v683, %v682
    %v694 = vpack.c.b16 %v685, %v684
    %v695 = vpack.c.b16 %v687, %v686
    %704 = vmatpush.bf16.msra.mxu0 %v695
    %705 = vmatpush.bf16.msra.mxu0 %v694
    %706 = vmatpush.bf16.msra.mxu0 %v693
    %707 = vmatpush.bf16.msra.mxu0 %v692
    %708 = vmatpush.bf16.msra.mxu0 %v691
    %709 = vmatpush.bf16.msra.mxu0 %v690
    %710 = vmatpush.bf16.msra.mxu0 %v689
    %711 = vmatpush.bf16.msra.mxu0 %v688
    %712 = vmatmul.bf16.gmra.mxu0 %v635
    %v713 = vpop.f32.mrf.mxu0
    %v714 = vadd.f32 %v654, %v713
    %v715 = vpop.f32.mrf.mxu0
    %716 = vdwg.mxu0
    %717 = vmax.xlane.f32.xlu0 %v714
    %v718 = vpop.xlane.xlu0 %717
    %v719 = vsub.f32 %v714, %v718
    %v720 = vmul.f32 %v719, 1.442695
    %v721 = vpow.pop %v720
    %722 = vadd.xlane.f32.xlu0 %v721
    %v723 = vpop.xlane.xlu0 %722
    %v724 = vlog2.pop %v723
    %v725 = vmul.f32 %v724, 0.6931472
    %v726 = vsub.f32 %v719, %v725
    %727 = vst [vmem:[#allocation2] sm:$0xff] %v726
    // Predicated region
    $region30: #{cnn_forward.1} parent=1 // pred_check
      _
    $region31: #{cnn_forward.1} parent=1 // pred_check_branch
      %729 = sbr.rel (0) target = $region33
    $region32: #{cnn_forward.1} parent=1 // pred_region
      %731 = vsyncadd [#allocation3], 0
      %s733 = sshll.u32 [#allocation2], 4
      %s734 = int_to_ptr.vmem [resolvable:$true] %s733
      %s735 = sshll.u32 %s7, 4
      %s736 = int_to_ptr.hbm [resolvable:$true] %s735
      %738 = dma.vmem_to_hbm [thread:$0]  %s734, 128, %s736, [#allocation3]
    $region33: #{cnn_forward.1} parent=1 // pred_fallthru
      _
    // Predicated region
    $region34: #{cnn_forward.1} parent=1 // pred_check
      _
    $region35: #{cnn_forward.1} parent=1 // pred_check_branch
      %740 = sbr.rel (0) target = $region37
    $region36: #{cnn_forward.1} parent=1 // pred_region
      %742 = dma.done [#allocation3], 128
    $region37: #{cnn_forward.1} parent=1 // pred_fallthru
      _
    %743 = vsyncpa [#allocation3], 1

</llo_original>
